<compile_context>
chip_gen: v7x
topology: tpu7x:2x2x1
jax: 0.10.0
libtpu: 0.0.40
codegen_flags: <defaults>
</compile_context>

<pallas_src>
import jax
import jax.numpy as jnp
from jax import lax
from jax.experimental import pallas as pl
from jax.experimental.pallas import tpu as pltpu

KSIZE = 3  # 3x3 conv


def _binconv_kernel(p_ref, w_ref, b_ref, o_ref):
    """One batch-block (B images) per grid step.

    p_ref: (B, 9*Cin, H*W) bf16  pre-binarized (+/-1/0) im2col patches
    w_ref: (Cout, 9*Cin)   bf16  binarized hyper-generated weights (resident)
    b_ref: (Cout, 1)       f32   bias (column -> broadcasts along the lane dim)
    o_ref: (B, Cout, H*W)  f32   lane-dense output (reshapes to NCHW for free)
    """
    w = w_ref[...]
    bias = b_ref[...]
    # B is small & static: a static Python loop == fully-unrolled fori_loop,
    # with static ref indices (zero-cost slices).  Each iteration's accumulator
    # is stored immediately, so live ranges stay bounded.
    for i in range(p_ref.shape[0]):
        acc = jnp.dot(w, p_ref[i], preferred_element_type=jnp.float32)  # (Cout, H*W)
        o_ref[i] = (acc + bias).astype(o_ref.dtype)


def _pick_batch_block(n, max_b=8):
    """Images per grid step.

    Big enough to amortize the ~0.35us/step fixed cost, small enough that the
    'parallel' grid keeps >= 2 steps (so both v7x TensorCores get real work).
    """
    if n <= 1:
        return 1
    target = min(max_b, n // 2)
    for b in range(target, 0, -1):
        if n % b == 0:
            return b
    return 1


@jax.jit
def binary_hyper_conv3x3(x_nchw, w_bin_oihw, bias):
    """x_nchw: (N, Cin, H, W) f32; w_bin_oihw: (Cout, Cin, 3, 3) +/-1; bias: (Cout,)."""
    n, cin, h, w = x_nchw.shape
    cout = w_bin_oihw.shape[0]
    kk = KSIZE * KSIZE
    bb = _pick_batch_block(n)

    # Activation binarization + bf16 cast in the wrapper (opt #1): sign() on the
    # raw (un-duplicated) input; +/-1/0 are exact in bf16, so both the im2col
    # array written by XLA and the per-step kernel DMA are half the old f32
    # bytes, and the in-kernel sign/cast is gone.  sign(0)=0 keeps zero-pad
    # equivalent to binarize-then-pad.
    x_bin = jnp.sign(x_nchw).astype(jnp.bfloat16)
    x_pad = jnp.pad(x_bin, ((0, 0), (0, 0), (1, 1), (1, 1)))

    # im2col: contraction dim ordered (cin, kh, kw) to match the OIHW weight reshape.
    taps = [x_pad[:, :, kh:kh + h, kw:kw + w]
            for kh in range(KSIZE) for kw in range(KSIZE)]
    patches = jnp.stack(taps, axis=2).reshape(n, cin * kk, h * w)   # (N, 9*Cin, H*W) bf16

    # Weights to matmul layout; +/-1 is exact in bf16 (portable across v5e/v6e/v7x
    # — v7x MXU has no int modes, so no int8 path here).  Bias stays f32.
    w2d = w_bin_oihw.reshape(cout, cin * kk).astype(jnp.bfloat16)   # (Cout, 9*Cin)
    b2d = bias.reshape(cout, 1).astype(jnp.float32)                 # (Cout, 1)

    # Advisory cost so XLA schedules correctly around the small custom call (opt #9).
    bytes_accessed = (n * cin * kk * h * w * 2      # bf16 patches
                      + cout * cin * kk * 2         # bf16 weights
                      + cout * 4                    # f32 bias
                      + n * cout * h * w * 4)       # f32 output
    cost = pl.CostEstimate(
        flops=2 * n * cout * (cin * kk) * (h * w),
        transcendentals=0,
        bytes_accessed=bytes_accessed,
    )

    out = pl.pallas_call(
        _binconv_kernel,
        out_shape=jax.ShapeDtypeStruct((n, cout, h * w), jnp.float32),
        grid_spec=pltpu.PrefetchScalarGridSpec(
            num_scalar_prefetch=0,
            grid=(n // bb,),
            in_specs=[
                pl.BlockSpec((bb, cin * kk, h * w), lambda i: (i, 0, 0)),
                pl.BlockSpec((cout, cin * kk), lambda i: (0, 0)),   # resident
                pl.BlockSpec((cout, 1), lambda i: (0, 0)),          # resident
            ],
            out_specs=pl.BlockSpec((bb, cout, h * w), lambda i: (i, 0, 0)),
        ),
        compiler_params=pltpu.CompilerParams(
            dimension_semantics=("parallel",)),
        cost_estimate=cost,
    )(patches, w2d, b2d)

    # (N, Cout, H*W) -> (N, Cout, H, W): pure reshape, no transpose.
    return out.reshape(n, cout, h, w)


def make_params(key, in_chs, out_chs, z_dim=9):
    """Deterministic reconstruction of the binarized-hypernetwork parameters."""
    k1, k2, k3 = jax.random.split(key, 3)
    # Per-filter latent codes: one z per (out_ch, in_ch) filter.
    z = jax.random.normal(k1, (out_chs * in_chs, z_dim), jnp.float32)
    # Hypernetwork weight (binarized inside the hypernetwork): z_dim -> k*k.
    hyper_w = jax.random.normal(k2, (z_dim, KSIZE * KSIZE), jnp.float32)
    w_real = z @ jnp.sign(hyper_w)                          # (out*in, 9)
    w_real = w_real.reshape(out_chs, in_chs, KSIZE, KSIZE)  # OIHW
    # Binarize the generated conv weights (weight_binarize=True).
    w_bin_oihw = jnp.sign(w_real)
    bias = jax.random.normal(k3, (out_chs,), jnp.float32) * 0.1
    return w_bin_oihw, bias


def reference_conv(x_nchw, w_bin_oihw, bias):
    """Pure-JAX reference with identical semantics (correctness check)."""
    xb = jnp.sign(x_nchw)
    out = lax.conv_general_dilated(
        xb, w_bin_oihw,
        window_strides=(1, 1),
        padding=((1, 1), (1, 1)),
        dimension_numbers=("NCHW", "OIHW", "NCHW"),
    )
    return out + bias[None, :, None, None]


if __name__ == "__main__":
    key = jax.random.PRNGKey(0)
    kx, kp = jax.random.split(key)

    # Small shapes consistent with the module (BinaryHyperConv3x3 defaults);
    # N=4 exercises the batched (B=2 per step, 2 grid steps) path.
    N, Cin, Cout, H, W = 4, 16, 16, 16, 16
    x = jax.random.normal(kx, (N, Cin, H, W), jnp.float32)
    w_bin, bias = make_params(kp, Cin, Cout)

    out = binary_hyper_conv3x3(x, w_bin, bias)
    out = jax.block_until_ready(out)

    ref = jax.block_until_ready(reference_conv(x, w_bin, bias))
    assert out.shape == (N, Cout, H, W), out.shape
    assert jnp.allclose(out, ref, atol=1e-4, rtol=1e-4), float(
        jnp.max(jnp.abs(out - ref))
    )
    print("KERNEL_OK")
</pallas_src>

<mosaic_0001>
module attributes {stable_mosaic.version = 11 : i64} {
  func.func @_binconv_kernel(%arg0: i32, %arg1: memref<2x144x256xbf16, #tpu.memory_space<vmem>>, %arg2: memref<16x144xbf16, #tpu.memory_space<vmem>>, %arg3: memref<16x1xf32, #tpu.memory_space<vmem>>, %arg4: memref<2x16x256xf32, #tpu.memory_space<vmem>>) attributes {dimension_semantics = [#tpu.dimension_semantics<parallel>], iteration_bounds = array<i64: 2>, scalar_prefetch = 0 : i64, scratch_operands = 0 : i64, tpu.core_type = #tpu.core_type<tc>, window_params = [{transform_indices = @transform_0, window_bounds = array<i64: 2, 144, 256>}, {pipeline_mode = #tpu.pipeline_mode<synchronous>, transform_indices = @transform_1, window_bounds = array<i64: 16, 144>}, {pipeline_mode = #tpu.pipeline_mode<synchronous>, transform_indices = @transform_2, window_bounds = array<i64: 16, 1>}, {transform_indices = @transform_3, window_bounds = array<i64: 2, 16, 256>}]} {
    %c0 = arith.constant 0 : index
    %c0_0 = arith.constant 0 : index
    %0 = vector.load %arg2[%c0, %c0_0] : memref<16x144xbf16, #tpu.memory_space<vmem>>, vector<16x144xbf16>
    %c0_1 = arith.constant 0 : index
    %c0_2 = arith.constant 0 : index
    %1 = vector.load %arg3[%c0_1, %c0_2] : memref<16x1xf32, #tpu.memory_space<vmem>>, vector<16x1xf32>
    %c0_3 = arith.constant 0 : index
    %c0_4 = arith.constant 0 : index
    %c0_5 = arith.constant 0 : index
    %2 = vector.load %arg1[%c0_3, %c0_4, %c0_5] : memref<2x144x256xbf16, #tpu.memory_space<vmem>>, vector<1x144x256xbf16>
    %3 = vector.shape_cast %2 : vector<1x144x256xbf16> to vector<144x256xbf16>
    %cst = arith.constant dense<0.000000e+00> : vector<16x256xf32>
    %4 = tpu.matmul %0, %3, %cst {dimension_numbers = #tpu.dot_dimension_numbers<[1], [0], [0], [1], [0, 0, 1, 1], [], []>} : vector<16x144xbf16>, vector<144x256xbf16>, vector<16x256xf32> -> vector<16x256xf32>
    %5 = vector.broadcast %1 : vector<16x1xf32> to vector<16x256xf32>
    %6 = arith.addf %4, %5 : vector<16x256xf32>
    %c0_6 = arith.constant 0 : index
    %c0_7 = arith.constant 0 : index
    %c0_8 = arith.constant 0 : index
    %7 = vector.load %arg4[%c0_6, %c0_7, %c0_8] : memref<2x16x256xf32, #tpu.memory_space<vmem>>, vector<1x16x256xf32>
    %8 = vector.shape_cast %7 : vector<1x16x256xf32> to vector<16x256xf32>
    %9 = vector.shape_cast %6 : vector<16x256xf32> to vector<1x16x256xf32>
    tpu.vector_store %arg4[%c0_6, %c0_7, %c0_8], %9 {strides = array<i32>} : memref<2x16x256xf32, #tpu.memory_space<vmem>>, vector<1x16x256xf32>,
    %c1 = arith.constant 1 : index
    %c0_9 = arith.constant 0 : index
    %c0_10 = arith.constant 0 : index
    %10 = vector.load %arg1[%c1, %c0_9, %c0_10] : memref<2x144x256xbf16, #tpu.memory_space<vmem>>, vector<1x144x256xbf16>
    %11 = vector.shape_cast %10 : vector<1x144x256xbf16> to vector<144x256xbf16>
    %cst_11 = arith.constant dense<0.000000e+00> : vector<16x256xf32>
    %12 = tpu.matmul %0, %11, %cst_11 {dimension_numbers = #tpu.dot_dimension_numbers<[1], [0], [0], [1], [0, 0, 1, 1], [], []>} : vector<16x144xbf16>, vector<144x256xbf16>, vector<16x256xf32> -> vector<16x256xf32>
    %13 = vector.broadcast %1 : vector<16x1xf32> to vector<16x256xf32>
    %14 = arith.addf %12, %13 : vector<16x256xf32>
    %c1_12 = arith.constant 1 : index
    %c0_13 = arith.constant 0 : index
    %c0_14 = arith.constant 0 : index
    %15 = vector.load %arg4[%c1_12, %c0_13, %c0_14] : memref<2x16x256xf32, #tpu.memory_space<vmem>>, vector<1x16x256xf32>
    %16 = vector.shape_cast %15 : vector<1x16x256xf32> to vector<16x256xf32>
    %17 = vector.shape_cast %14 : vector<16x256xf32> to vector<1x16x256xf32>
    tpu.vector_store %arg4[%c1_12, %c0_13, %c0_14], %17 {strides = array<i32>} : memref<2x16x256xf32, #tpu.memory_space<vmem>>, vector<1x16x256xf32>,
    return
  }
  func.func @transform_0(%arg0: i32) -> (i32, i32, i32) {
    %c0_i32 = arith.constant 0 : i32
    %c0_i32_0 = arith.constant 0 : i32
    %c0_i32_1 = arith.constant 0 : i32
    return %arg0, %c0_i32, %c0_i32_0 : i32, i32, i32
  }
  func.func @transform_1(%arg0: i32) -> (i32, i32) {
    %c0_i32 = arith.constant 0 : i32
    %c0_i32_0 = arith.constant 0 : i32
    %c0_i32_1 = arith.constant 0 : i32
    return %c0_i32, %c0_i32_0 : i32, i32
  }
  func.func @transform_2(%arg0: i32) -> (i32, i32) {
    %c0_i32 = arith.constant 0 : i32
    %c0_i32_0 = arith.constant 0 : i32
    %c0_i32_1 = arith.constant 0 : i32
    return %c0_i32, %c0_i32_0 : i32, i32
  }
  func.func @transform_3(%arg0: i32) -> (i32, i32, i32) {
    %c0_i32 = arith.constant 0 : i32
    %c0_i32_0 = arith.constant 0 : i32
    %c0_i32_1 = arith.constant 0 : i32
    return %arg0, %c0_i32, %c0_i32_0 : i32, i32, i32
  }
}

</mosaic_0001>

<llo_original>
// kernel: binary_hyper_conv3x3.1
$region0: #{binary_hyper_conv3x3.1}
  #allocation0 [shape = 'u32[]', space=smem, size = 0x4, offset = 0x4, fixed_abs, tag = 'smem constant byte address 0x4 - core index']
  #allocation1 [shape = 'u32[144,128]{1,0:T(1,128)}', space=vmem, size = 0x12000, scoped, tag = 'internal scratch']
  %s0 = inlined_call_operand.vmem [shape: bf16[4,144,256], index: 0, kind: input, shape index: {}]
  %s1 = inlined_call_operand.vmem [shape: bf16[16,144], index: 1, kind: input, shape index: {}]
  %s2 = inlined_call_operand.vmem [shape: f32[16,1], index: 2, kind: input, shape index: {}]
  %s3 = inlined_call_operand.vmem [shape: f32[4,16,256], index: 3, kind: output, shape index: {}]
  %s4 = sld [smem:[#allocation0]]
  $region45: #{binary_hyper_conv3x3.1} parent=0
    _
  %s6 = ssub.s32 1, %s4
  %s7 = scalar_select 0, %s6, %s4
  loop: start=0, step=1, limit=4
  $region2: #{binary_hyper_conv3x3.1} parent=0 // loop_pre_header
    _
  $region3: #{binary_hyper_conv3x3.1} parent=0 // loop_header
    %s9 = sphi 0, %s13
    %p10 = scmp.ge.s32.totalorder %s9, 4
    %s19 = sphi 0, %s21
    %s22 = sphi 0, %s19
    %s23 = sphi 0, %s22
    %s39 = sphi 0, %s23
    %s43 = sphi 0, %s43
    %s45 = sphi 0, %s43
    %s46 = sphi 0, %s45
    %s60 = sphi 0, %s46
    %s64 = sphi 0, %s64
    %s66 = sphi 0, %s64
    %s67 = sphi 0, %s66
    %s81 = sphi 0, %s67
    %s87 = sphi 0, %s89
    %s90 = sphi 0, %s87
    %s91 = sphi 0, %s90
    %s107 = sphi 0, %s91
  $region4: #{binary_hyper_conv3x3.1} parent=0 // loop_header_branch
    %12 = sbr.rel (%p10) target = $region8
  $region5: #{binary_hyper_conv3x3.1} parent=0 // loop_body
    %s14 = ssub.s32 %s9, 1
    %s15 = ssub.s32 %s9, 2
    %s16 = sadd.s32 %s9, 1
    %s17 = ssub.s32 %s9, %s16
    %p18 = scmp.eq.s32.totalorder %s17, 0
    %s20 = sadd.s32 %s19, 1
    %s21 = scalar_select %p18, %s19, %s20
    %p24 = pneg %p18
    %p25 = scmp.eq.s32.totalorder %s9, 1
    %p26 = por %p24, %p25
    %p27 = scmp.ne.s32.totalorder %s19, %s22
    %p28 = scmp.eq.s32.totalorder %s9, 0
    %p29 = por %p27, %p28
    %p30 = scmp.ne.s32.totalorder %s19, %s22
    %p31 = scmp.eq.s32.totalorder %s14, 1
    %p32 = por %p30, %p31
    %p33 = scmp.ne.s32.totalorder %s22, %s23
    %p34 = scmp.eq.s32.totalorder %s14, 0
    %p35 = por %p33, %p34
    %p36 = scmp.ne.s32.totalorder %s22, %s23
    %p37 = scmp.eq.s32.totalorder %s15, 1
    %p38 = por %p36, %p37
    %p40 = scmp.ne.s32.totalorder %s23, %s39
    %p41 = scmp.eq.s32.totalorder %s15, 0
    %p42 = por %p40, %p41
    %s44 = sadd.s32 %s43, 1
    %p47 = scmp.eq.s32.totalorder %s9, 1
    %p48 = scmp.ne.s32.totalorder %s43, %s45
    %p49 = scmp.eq.s32.totalorder %s9, 0
    %p50 = por %p48, %p49
    %p51 = scmp.ne.s32.totalorder %s43, %s45
    %p52 = scmp.eq.s32.totalorder %s14, 1
    %p53 = por %p51, %p52
    %p54 = scmp.ne.s32.totalorder %s45, %s46
    %p55 = scmp.eq.s32.totalorder %s14, 0
    %p56 = por %p54, %p55
    %p57 = scmp.ne.s32.totalorder %s45, %s46
    %p58 = scmp.eq.s32.totalorder %s15, 1
    %p59 = por %p57, %p58
    %p61 = scmp.ne.s32.totalorder %s46, %s60
    %p62 = scmp.eq.s32.totalorder %s15, 0
    %p63 = por %p61, %p62
    %s65 = sadd.s32 %s64, 1
    %p68 = scmp.eq.s32.totalorder %s9, 1
    %p69 = scmp.ne.s32.totalorder %s64, %s66
    %p70 = scmp.eq.s32.totalorder %s9, 0
    %p71 = por %p69, %p70
    %p72 = scmp.ne.s32.totalorder %s64, %s66
    %p73 = scmp.eq.s32.totalorder %s14, 1
    %p74 = por %p72, %p73
    %p75 = scmp.ne.s32.totalorder %s66, %s67
    %p76 = scmp.eq.s32.totalorder %s14, 0
    %p77 = por %p75, %p76
    %p78 = scmp.ne.s32.totalorder %s66, %s67
    %p79 = scmp.eq.s32.totalorder %s15, 1
    %p80 = por %p78, %p79
    %p82 = scmp.ne.s32.totalorder %s67, %s81
    %p83 = scmp.eq.s32.totalorder %s15, 0
    %p84 = por %p82, %p83
    %s85 = ssub.s32 %s9, %s16
    %p86 = scmp.eq.s32.totalorder %s85, 0
    %s88 = sadd.s32 %s87, 1
    %s89 = scalar_select %p86, %s87, %s88
    %p92 = pneg %p86
    %p93 = scmp.eq.s32.totalorder %s9, 1
    %p94 = por %p92, %p93
    %p95 = scmp.ne.s32.totalorder %s87, %s90
    %p96 = scmp.eq.s32.totalorder %s9, 0
    %p97 = por %p95, %p96
    %p98 = scmp.ne.s32.totalorder %s87, %s90
    %p99 = scmp.eq.s32.totalorder %s14, 1
    %p100 = por %p98, %p99
    %p101 = scmp.ne.s32.totalorder %s90, %s91
    %p102 = scmp.eq.s32.totalorder %s14, 0
    %p103 = por %p101, %p102
    %p104 = scmp.ne.s32.totalorder %s90, %s91
    %p105 = scmp.eq.s32.totalorder %s15, 1
    %p106 = por %p104, %p105
    %p108 = scmp.ne.s32.totalorder %s91, %s107
    %p109 = scmp.eq.s32.totalorder %s15, 0
    %p110 = por %p108, %p109
    %p111 = scmp.le.s32.totalorder 1, %s9
    %p112 = scmp.lt.s32.totalorder %s9, 3
    %p113 = pnand %p111, %p112
    %p114 = pneg %p113
    // Predicated region
    $region9: #{binary_hyper_conv3x3.1} parent=5 // pred_check
      _
    $region10: #{binary_hyper_conv3x3.1} parent=5 // pred_check_branch
      %116 = sbr.rel (%p113) target = $region12
    $region11: #{binary_hyper_conv3x3.1} parent=5 // pred_region
      %s117 = ssub.s32 %s9, 1
      // Predicated region
      $region13: #{binary_hyper_conv3x3.1} parent=11 // pred_check
        %p118 = pneg %p56
      $region14: #{binary_hyper_conv3x3.1} parent=11 // pred_check_branch
        %120 = sbr.rel (%p118) target = $region16
      $region15: #{binary_hyper_conv3x3.1} parent=11 // pred_region
        _
      $region16: #{binary_hyper_conv3x3.1} parent=11 // pred_fallthru
        _
      // Predicated region
      $region17: #{binary_hyper_conv3x3.1} parent=11 // pred_check
        %p121 = pneg %p77
      $region18: #{binary_hyper_conv3x3.1} parent=11 // pred_check_branch
        %123 = sbr.rel (%p121) target = $region20
      $region19: #{binary_hyper_conv3x3.1} parent=11 // pred_region
        _
      $region20: #{binary_hyper_conv3x3.1} parent=11 // pred_fallthru
        _
    $region12: #{binary_hyper_conv3x3.1} parent=5 // pred_fallthru
      _
    %p124 = scmp.lt.s32.totalorder %s9, 2
    // Predicated region
    $region21: #{binary_hyper_conv3x3.1} parent=5 // pred_check
      %p125 = pneg %p124
    $region22: #{binary_hyper_conv3x3.1} parent=5 // pred_check_branch
      %127 = sbr.rel (%p125) target = $region24
    $region23: #{binary_hyper_conv3x3.1} parent=5 // pred_region
      // Predicated region
      $region25: #{binary_hyper_conv3x3.1} parent=23 // pred_check
        %p128 = pneg %p29
      $region26: #{binary_hyper_conv3x3.1} parent=23 // pred_check_branch
        %130 = sbr.rel (%p128) target = $region28
      $region27: #{binary_hyper_conv3x3.1} parent=23 // pred_region
        %s131 = smul.u32 2, %s9
        %p132 = scmp.lt.s32.totalorder %s131, 3
        %s133 = scalar_select %p132, %s131, 3
        %s134 = smul.addr %s133, 36
        %s135 = smul.addr %s134, 4
        %s136 = scalar_lea.vmem %s0, %s135
        %s137 = smul.u32 2, %s9
      $region28: #{binary_hyper_conv3x3.1} parent=23 // pred_fallthru
        _
    $region24: #{binary_hyper_conv3x3.1} parent=5 // pred_fallthru
      _
    %p138 = scmp.le.s32.totalorder 1, %s9
    %p139 = scmp.lt.s32.totalorder %s9, 3
    %p140 = pnand %p138, %p139
    %p141 = pneg %p140
    // Predicated region
    $region29: #{binary_hyper_conv3x3.1} parent=5 // pred_check
      _
    $region30: #{binary_hyper_conv3x3.1} parent=5 // pred_check_branch
      %143 = sbr.rel (%p140) target = $region32
    $region31: #{binary_hyper_conv3x3.1} parent=5 // pred_region
      %s144 = ssub.s32 %s9, 1
      %s145 = smul.u32 2, %s14
      %p146 = scmp.lt.s32.totalorder %s145, 3
      %s147 = scalar_select %p146, %s145, 3
      %s148 = smul.addr %s147, 36
      %s149 = smul.addr %s148, 4
      %s150 = scalar_lea.vmem %s0, %s149
      %p151 = pneg %p35
      %p152 = pneg %p32
      %p153 = pneg %p56
      %p154 = pneg %p53
      %p155 = pneg %p77
      %p156 = pneg %p74
      %p157 = pneg %p103
      %p158 = pneg %p100
      %s159 = smul.u32 2, %s14
      %p160 = scmp.lt.s32.totalorder %s159, 3
      %s161 = scalar_select %p160, %s159, 3
      %s162 = smul.addr %s161, 4
      %s163 = smul.addr %s162, 8
      %s164 = scalar_lea.vmem %s3, %s163
      %s165 = smul.u32 2, %s14
      %p166 = scmp.lt.s32.totalorder %s165, 3
      %s167 = scalar_select %p166, %s165, 3
      %s168 = smul.addr %s167, 36
      %s169 = smul.addr %s168, 4
      %s170 = scalar_lea.vmem %s0, %s169
      %s171 = smul.u32 2, %s14
      %s172 = smul.u32 2, %s14
      %p173 = scmp.lt.s32.totalorder %s172, 3
      %s174 = scalar_select %p173, %s172, 3
      %s175 = smul.addr %s174, 4
      %s176 = smul.addr %s175, 8
      %s177 = scalar_lea.vmem %s3, %s176
      %s178 = smul.u32 2, %s14
      %v180 = vld [vmem:[%s1] sm:$0xff]
      %v181 = vld [vmem:[%s1 + $0x8] sm:$0xff]
      %v182 = vld [vmem:[%s2] sm:$0xff]
      %v183 = vld [vmem:[%s2 + $0x8] sm:$0xff]
      %v184 = vld [vmem:[%s170] sm:$0xff]
      %v185 = vld [vmem:[%s170 + $0x8] sm:$0xff]
      %v186 = vld [vmem:[%s170 + $0x10] sm:$0xff]
      %v187 = vld [vmem:[%s170 + $0x18] sm:$0xff]
      %v188 = vld [vmem:[%s170 + $0x20] sm:$0xff]
      %v189 = vld [vmem:[%s170 + $0x28] sm:$0xff]
      %v190 = vld [vmem:[%s170 + $0x30] sm:$0xff]
      %v191 = vld [vmem:[%s170 + $0x38] sm:$0xff]
      %v192 = vld [vmem:[%s170 + $0x40] sm:$0xff]
      %v193 = vld [vmem:[%s170 + $0x48] sm:$0xff]
      %v194 = vld [vmem:[%s170 + $0x50] sm:$0xff]
      %v195 = vld [vmem:[%s170 + $0x58] sm:$0xff]
      %v196 = vld [vmem:[%s170 + $0x60] sm:$0xff]
      %v197 = vld [vmem:[%s170 + $0x68] sm:$0xff]
      %v198 = vld [vmem:[%s170 + $0x70] sm:$0xff]
      %v199 = vld [vmem:[%s170 + $0x78] sm:$0xff]
      %v200 = vld [vmem:[%s170 + $0x80] sm:$0xff]
      %v201 = vld [vmem:[%s170 + $0x88] sm:$0xff]
      %203 = vset.pattern.permute.xlu0 0
      %204 = vperm.xlu0 %203, %v182
      %v205 = vpop.permute.xlu0 %204
      %208 = vset.pattern.permute.xlu0 0
      %209 = vperm.xlu0 %208, %v183
      %v210 = vpop.permute.xlu0 %209
      %v214 = vunpack.c.l.b16 %v180
      %v215 = vunpack.c.h.b16 %v180
      %v216 = vunpack.c.l.b16 %v181
      %v217 = vunpack.c.h.b16 %v181
      %v218 = vpack.c.b16 %v216, %v214
      %v219 = vpack.c.b16 %v217, %v215
      %v239 = vunpack.c.l.b16 %v184
      %v240 = vunpack.c.h.b16 %v184
      %v241 = vunpack.c.l.b16 %v185
      %v242 = vunpack.c.h.b16 %v185
      %v243 = vunpack.c.l.b16 %v186
      %v244 = vunpack.c.h.b16 %v186
      %v245 = vunpack.c.l.b16 %v187
      %v246 = vunpack.c.h.b16 %v187
      %v247 = vunpack.c.l.b16 %v188
      %v248 = vunpack.c.h.b16 %v188
      %v249 = vunpack.c.l.b16 %v189
      %v250 = vunpack.c.h.b16 %v189
      %v251 = vunpack.c.l.b16 %v190
      %v252 = vunpack.c.h.b16 %v190
      %v253 = vunpack.c.l.b16 %v191
      %v254 = vunpack.c.h.b16 %v191
      %v255 = vunpack.c.l.b16 %v192
      %v256 = vunpack.c.h.b16 %v192
      %v257 = vunpack.c.l.b16 %v193
      %v258 = vunpack.c.h.b16 %v193
      %v259 = vunpack.c.l.b16 %v194
      %v260 = vunpack.c.h.b16 %v194
      %v261 = vunpack.c.l.b16 %v195
      %v262 = vunpack.c.h.b16 %v195
      %v263 = vunpack.c.l.b16 %v196
      %v264 = vunpack.c.h.b16 %v196
      %v265 = vunpack.c.l.b16 %v197
      %v266 = vunpack.c.h.b16 %v197
      %v267 = vunpack.c.l.b16 %v198
      %v268 = vunpack.c.h.b16 %v198
      %v269 = vunpack.c.l.b16 %v199
      %v270 = vunpack.c.h.b16 %v199
      %v271 = vunpack.c.l.b16 %v200
      %v272 = vunpack.c.h.b16 %v200
      %v273 = vunpack.c.l.b16 %v201
      %v274 = vunpack.c.h.b16 %v201
      %v275 = vpack.c.b16 %v241, %v239
      %v276 = vpack.c.b16 %v242, %v240
      %v277 = vpack.c.b16 %v245, %v243
      %v278 = vpack.c.b16 %v246, %v244
      %v279 = vpack.c.b16 %v249, %v247
      %v280 = vpack.c.b16 %v250, %v248
      %v281 = vpack.c.b16 %v253, %v251
      %v282 = vpack.c.b16 %v254, %v252
      %v283 = vpack.c.b16 %v257, %v255
      %v284 = vpack.c.b16 %v258, %v256
      %v285 = vpack.c.b16 %v261, %v259
      %v286 = vpack.c.b16 %v262, %v260
      %v287 = vpack.c.b16 %v265, %v263
      %v288 = vpack.c.b16 %v266, %v264
      %v289 = vpack.c.b16 %v269, %v267
      %v290 = vpack.c.b16 %v270, %v268
      %v291 = vpack.c.b16 %v273, %v271
      %v292 = vpack.c.b16 %v274, %v272
      %vm311 = vcmask 130048
      %v313 = vsel %vm311, %v219, 0
      %315 = vmatprep.subr.bf16.mxu0 %v276
      %316 = vmatpush1.bf16.msra.mxu0 %v275
      %317 = vmatprep.subr.bf16.mxu0 %v278
      %318 = vmatpush1.bf16.msra.mxu0 %v277
      %319 = vmatprep.subr.bf16.mxu0 %v280
      %320 = vmatpush1.bf16.msra.mxu0 %v279
      %321 = vmatprep.subr.bf16.mxu0 %v282
      %322 = vmatpush1.bf16.msra.mxu0 %v281
      %323 = vmatprep.subr.bf16.mxu0 %v284
      %324 = vmatpush1.bf16.msra.mxu0 %v283
      %325 = vmatprep.subr.bf16.mxu0 %v286
      %326 = vmatpush1.bf16.msra.mxu0 %v285
      %327 = vmatprep.subr.bf16.mxu0 %v288
      %328 = vmatpush1.bf16.msra.mxu0 %v287
      %329 = vmatprep.subr.bf16.mxu0 %v290
      %330 = vmatpush1.bf16.msra.mxu0 %v289
      %331 = vmatprep.subr.bf16.mxu0 %v292
      %332 = vmatpush1.bf16.msra.mxu0 %v291
      %333 = vmatprep.subr.bf16.mxu0 0
      %334 = vmatpush1.bf16.msra.mxu0 0
      %335 = vmatprep.subr.bf16.mxu0 0
      %336 = vmatpush1.bf16.msra.mxu0 0
      %337 = vmatprep.subr.bf16.mxu0 0
      %338 = vmatpush1.bf16.msra.mxu0 0
      %339 = vmatprep.subr.bf16.mxu0 0
      %340 = vmatpush1.bf16.msra.mxu0 0
      %341 = vmatprep.subr.bf16.mxu0 0
      %342 = vmatpush1.bf16.msra.mxu0 0
      %343 = vmatprep.subr.bf16.mxu0 0
      %344 = vmatpush1.bf16.msra.mxu0 0
      %345 = vmatprep.subr.bf16.mxu0 0
      %346 = vmatpush1.bf16.msra.mxu0 0
      %347 = vmatprep.mubr.bf16.mxu0 %v313
      %348 = vmatmul.mubr.bf16.gmra.mrb[0].mxu0 %v218
      %v349 = vpop.f32.mrb[0].mxu0
      %v350 = vadd.f32 %v205, %v349
      %v351 = vpop.f32.mrb[0].mxu0
      %v352 = vadd.f32 %v205, %v351
      %v353 = vpop.f32.mrb[0].mxu0
      %v354 = vadd.f32 %v210, %v353
      %v355 = vpop.f32.mrb[0].mxu0
      %v356 = vadd.f32 %v210, %v355
      %357 = vdwg.mxu0
      %358 = vst [vmem:[%s177] sm:$0xff] %v350
      %359 = vst [vmem:[%s177 + $0x8] sm:$0xff] %v352
      %360 = vst [vmem:[%s177 + $0x10] sm:$0xff] %v354
      %361 = vst [vmem:[%s177 + $0x18] sm:$0xff] %v356
      %s362 = scalar_lea.vmem %s170, 144
      %v363 = vld [vmem:[%s362] sm:$0xff]
      %v364 = vld [vmem:[%s362 + $0x8] sm:$0xff]
      %v365 = vld [vmem:[%s362 + $0x10] sm:$0xff]
      %v366 = vld [vmem:[%s362 + $0x18] sm:$0xff]
      %v367 = vld [vmem:[%s362 + $0x20] sm:$0xff]
      %v368 = vld [vmem:[%s362 + $0x28] sm:$0xff]
      %v369 = vld [vmem:[%s362 + $0x30] sm:$0xff]
      %v370 = vld [vmem:[%s362 + $0x38] sm:$0xff]
      %v371 = vld [vmem:[%s362 + $0x40] sm:$0xff]
      %v372 = vld [vmem:[%s362 + $0x48] sm:$0xff]
      %v373 = vld [vmem:[%s362 + $0x50] sm:$0xff]
      %v374 = vld [vmem:[%s362 + $0x58] sm:$0xff]
      %v375 = vld [vmem:[%s362 + $0x60] sm:$0xff]
      %v376 = vld [vmem:[%s362 + $0x68] sm:$0xff]
      %v377 = vld [vmem:[%s362 + $0x70] sm:$0xff]
      %v378 = vld [vmem:[%s362 + $0x78] sm:$0xff]
      %v379 = vld [vmem:[%s362 + $0x80] sm:$0xff]
      %v380 = vld [vmem:[%s362 + $0x88] sm:$0xff]
      %v399 = vunpack.c.l.b16 %v363
      %v400 = vunpack.c.h.b16 %v363
      %v401 = vunpack.c.l.b16 %v364
      %v402 = vunpack.c.h.b16 %v364
      %v403 = vunpack.c.l.b16 %v365
      %v404 = vunpack.c.h.b16 %v365
      %v405 = vunpack.c.l.b16 %v366
      %v406 = vunpack.c.h.b16 %v366
      %v407 = vunpack.c.l.b16 %v367
      %v408 = vunpack.c.h.b16 %v367
      %v409 = vunpack.c.l.b16 %v368
      %v410 = vunpack.c.h.b16 %v368
      %v411 = vunpack.c.l.b16 %v369
      %v412 = vunpack.c.h.b16 %v369
      %v413 = vunpack.c.l.b16 %v370
      %v414 = vunpack.c.h.b16 %v370
      %v415 = vunpack.c.l.b16 %v371
      %v416 = vunpack.c.h.b16 %v371
      %v417 = vunpack.c.l.b16 %v372
      %v418 = vunpack.c.h.b16 %v372
      %v419 = vunpack.c.l.b16 %v373
      %v420 = vunpack.c.h.b16 %v373
      %v421 = vunpack.c.l.b16 %v374
      %v422 = vunpack.c.h.b16 %v374
      %v423 = vunpack.c.l.b16 %v375
      %v424 = vunpack.c.h.b16 %v375
      %v425 = vunpack.c.l.b16 %v376
      %v426 = vunpack.c.h.b16 %v376
      %v427 = vunpack.c.l.b16 %v377
      %v428 = vunpack.c.h.b16 %v377
      %v429 = vunpack.c.l.b16 %v378
      %v430 = vunpack.c.h.b16 %v378
      %v431 = vunpack.c.l.b16 %v379
      %v432 = vunpack.c.h.b16 %v379
      %v433 = vunpack.c.l.b16 %v380
      %v434 = vunpack.c.h.b16 %v380
      %v435 = vpack.c.b16 %v401, %v399
      %v436 = vpack.c.b16 %v402, %v400
      %v437 = vpack.c.b16 %v405, %v403
      %v438 = vpack.c.b16 %v406, %v404
      %v439 = vpack.c.b16 %v409, %v407
      %v440 = vpack.c.b16 %v410, %v408
      %v441 = vpack.c.b16 %v413, %v411
      %v442 = vpack.c.b16 %v414, %v412
      %v443 = vpack.c.b16 %v417, %v415
      %v444 = vpack.c.b16 %v418, %v416
      %v445 = vpack.c.b16 %v421, %v419
      %v446 = vpack.c.b16 %v422, %v420
      %v447 = vpack.c.b16 %v425, %v423
      %v448 = vpack.c.b16 %v426, %v424
      %v449 = vpack.c.b16 %v429, %v427
      %v450 = vpack.c.b16 %v430, %v428
      %v451 = vpack.c.b16 %v433, %v431
      %v452 = vpack.c.b16 %v434, %v432
      %471 = vmatprep.subr.bf16.mxu0 %v436
      %472 = vmatpush1.bf16.msra.mxu0 %v435
      %473 = vmatprep.subr.bf16.mxu0 %v438
      %474 = vmatpush1.bf16.msra.mxu0 %v437
      %475 = vmatprep.subr.bf16.mxu0 %v440
      %476 = vmatpush1.bf16.msra.mxu0 %v439
      %477 = vmatprep.subr.bf16.mxu0 %v442
      %478 = vmatpush1.bf16.msra.mxu0 %v441
      %479 = vmatprep.subr.bf16.mxu0 %v444
      %480 = vmatpush1.bf16.msra.mxu0 %v443
      %481 = vmatprep.subr.bf16.mxu0 %v446
      %482 = vmatpush1.bf16.msra.mxu0 %v445
      %483 = vmatprep.subr.bf16.mxu0 %v448
      %484 = vmatpush1.bf16.msra.mxu0 %v447
      %485 = vmatprep.subr.bf16.mxu0 %v450
      %486 = vmatpush1.bf16.msra.mxu0 %v449
      %487 = vmatprep.subr.bf16.mxu0 %v452
      %488 = vmatpush1.bf16.msra.mxu0 %v451
      %489 = vmatprep.subr.bf16.mxu0 0
      %490 = vmatpush1.bf16.msra.mxu0 0
      %491 = vmatprep.subr.bf16.mxu0 0
      %492 = vmatpush1.bf16.msra.mxu0 0
      %493 = vmatprep.subr.bf16.mxu0 0
      %494 = vmatpush1.bf16.msra.mxu0 0
      %495 = vmatprep.subr.bf16.mxu0 0
      %496 = vmatpush1.bf16.msra.mxu0 0
      %497 = vmatprep.subr.bf16.mxu0 0
      %498 = vmatpush1.bf16.msra.mxu0 0
      %499 = vmatprep.subr.bf16.mxu0 0
      %500 = vmatpush1.bf16.msra.mxu0 0
      %501 = vmatprep.subr.bf16.mxu0 0
      %502 = vmatpush1.bf16.msra.mxu0 0
      %503 = vmatprep.mubr.bf16.mxu0 %v313
      %504 = vmatmul.mubr.bf16.gmra.mrb[0].mxu0 %v218
      %v505 = vpop.f32.mrb[0].mxu0
      %v506 = vadd.f32 %v205, %v505
      %v507 = vpop.f32.mrb[0].mxu0
      %v508 = vadd.f32 %v205, %v507
      %v509 = vpop.f32.mrb[0].mxu0
      %v510 = vadd.f32 %v210, %v509
      %v511 = vpop.f32.mrb[0].mxu0
      %v512 = vadd.f32 %v210, %v511
      %513 = vdwg.mxu0
      %s514 = scalar_lea.vmem %s177, 32
      %515 = vst [vmem:[%s514] sm:$0xff] %v506
      %516 = vst [vmem:[%s514 + $0x8] sm:$0xff] %v508
      %517 = vst [vmem:[%s514 + $0x10] sm:$0xff] %v510
      %518 = vst [vmem:[%s514 + $0x18] sm:$0xff] %v512
      %s519 = smul.u32 2, %s14
      %p520 = scmp.lt.s32.totalorder %s519, 3
      %s521 = scalar_select %p520, %s519, 3
      %s522 = smul.addr %s521, 4
      %s523 = smul.addr %s522, 8
      %s524 = scalar_lea.vmem %s3, %s523
      // Predicated region
      $region33: #{binary_hyper_conv3x3.1} parent=31 // pred_check
        %p525 = pneg %p100
      $region34: #{binary_hyper_conv3x3.1} parent=31 // pred_check_branch
        %527 = sbr.rel (%p525) target = $region36
      $region35: #{binary_hyper_conv3x3.1} parent=31 // pred_region
        %s528 = smul.u32 2, %s14
      $region36: #{binary_hyper_conv3x3.1} parent=31 // pred_fallthru
        _
    $region32: #{binary_hyper_conv3x3.1} parent=5 // pred_fallthru
      _
    %p529 = scmp.le.s32.totalorder 2, %s9
    // Predicated region
    $region37: #{binary_hyper_conv3x3.1} parent=5 // pred_check
      %p530 = pneg %p529
    $region38: #{binary_hyper_conv3x3.1} parent=5 // pred_check_branch
      %532 = sbr.rel (%p530) target = $region40
    $region39: #{binary_hyper_conv3x3.1} parent=5 // pred_region
      %s533 = ssub.s32 %s9, 2
      // Predicated region
      $region41: #{binary_hyper_conv3x3.1} parent=39 // pred_check
        %p534 = pneg %p106
      $region42: #{binary_hyper_conv3x3.1} parent=39 // pred_check_branch
        %536 = sbr.rel (%p534) target = $region44
      $region43: #{binary_hyper_conv3x3.1} parent=39 // pred_region
        %s537 = smul.u32 2, %s15
        %p538 = scmp.lt.s32.totalorder %s537, 3
        %s539 = scalar_select %p538, %s537, 3
        %s540 = smul.addr %s539, 4
        %s541 = smul.addr %s540, 8
        %s542 = scalar_lea.vmem %s3, %s541
      $region44: #{binary_hyper_conv3x3.1} parent=39 // pred_fallthru
        _
    $region40: #{binary_hyper_conv3x3.1} parent=5 // pred_fallthru
      _
  $region6: #{binary_hyper_conv3x3.1} parent=0 // loop_footer
    %s13 = sadd.s32 1, %s9
  $region7: #{binary_hyper_conv3x3.1} parent=0 // loop_footer_branch
    %8 = sbr.rel target = $region3
  $region8: #{binary_hyper_conv3x3.1} parent=0 // loop_exit
    _

</llo_original>
